<compile_context>
chip_gen: v7x
topology: tpu7x:2x2x1
jax: 0.10.0
libtpu: 0.0.40
codegen_flags: <defaults>
</compile_context>

<pallas_src>
import functools

import jax
import jax.numpy as jnp
from jax.experimental import pallas as pl
from jax.experimental.pallas import tpu as pltpu


def _nodevec_kernel(nv1_ref, nv2_ref, w1_ref, b1_ref, w2_ref, b2_ref,
                    n1_ref, n2_ref, *, alpha):
    # n1 = tanh(alpha * (nv1 @ W1^T + b1)); same for n2.  Runs once (no grid),
    # so the Linear+tanh work is never redone per adjacency row-block.
    n1_ref[...] = jnp.tanh(
        alpha * (jnp.dot(nv1_ref[...], w1_ref[...],
                         preferred_element_type=jnp.float32) + b1_ref[...]))
    n2_ref[...] = jnp.tanh(
        alpha * (jnp.dot(nv2_ref[...], w2_ref[...],
                         preferred_element_type=jnp.float32) + b2_ref[...]))


def _adj_topk_kernel(lhs_ref, rhs_ref, adj_ref, *, alpha, topk):
    # Fused antisymmetric matmul:  a = n1 @ n2.T - n2 @ n1.T
    #   lhs = [n1 | n2]   (row_tile, 2*dim)
    #   rhs = [n2 | -n1]  (n_pad,    2*dim)
    # -> one MXU contraction over K = 2*dim (half the pushes vs two matmuls).
    a = jax.lax.dot_general(lhs_ref[...], rhs_ref[...],
                            (((1,), (1,)), ((), ())),
                            preferred_element_type=jnp.float32)       # (rt, n_pad)
    adj = jnp.maximum(jnp.tanh(alpha * a), 0.0)                       # relu(tanh(.))

    # Per-row top-k via k masked max-reductions.  Each iteration removes
    # exactly ONE occurrence of the current row max, so after `topk` steps
    # `kth` is the k-th largest value (with multiplicity); keeping adj >= kth
    # is equivalent to the rank-count mask (#strictly-greater < k).  Only
    # exact positive float ties straddling the k-boundary differ from
    # torch.topk (measure zero for continuous inputs).
    rt, ncol = adj.shape
    col = jax.lax.broadcasted_iota(jnp.int32, (rt, ncol), 1)
    work = adj
    kth = jnp.zeros((rt, 1), jnp.float32)
    for _ in range(topk):                    # topk is small & static: unrolled
        cur = jnp.max(work, axis=-1, keepdims=True)                   # (rt, 1)
        first = jnp.min(jnp.where(work == cur, col, ncol),
                        axis=-1, keepdims=True)                       # (rt, 1)
        work = jnp.where(col == first, -jnp.inf, work)
        kth = cur
    adj_ref[...] = jnp.where(adj >= kth, adj, 0.0)


def graph_constructor_forward(idx, emb1, emb2, lin1_w, lin1_b, lin2_w, lin2_b,
                              *, k, alpha=3.0, row_tile=128):
    """idx: (n,) int; emb*: (nnodes, dim); lin*_w: (dim, dim) PyTorch layout; lin*_b: (dim,)."""
    n = int(idx.shape[0])
    nnodes, dim = emb1.shape
    assert k <= n, "top-k must not exceed the number of nodes"

    # Lane-dense tiling: row_tile is a multiple of 128, n is padded up to a
    # multiple of row_tile (no one-giant-block fallback).
    row_tile = max(128, int(row_tile))
    row_tile = ((row_tile + 127) // 128) * 128
    n_pad = ((n + row_tile - 1) // row_tile) * row_tile

    idx = idx.astype(jnp.int32)
    # Embedding gather as a plain XLA gather in the wrapper (done once); the
    # heavy per-node Linear+tanh and everything downstream runs in Pallas.
    # TODO(synk): an all-in-kernel gather would use PrefetchScalarGridSpec +
    # pl.Element index maps instead of a one-hot matmul.
    nv1 = emb1[idx].astype(jnp.float32)
    nv2 = emb2[idx].astype(jnp.float32)
    pad = n_pad - n
    nv1 = jnp.pad(nv1, ((0, pad), (0, 0)))
    nv2 = jnp.pad(nv2, ((0, pad), (0, 0)))

    w1t = lin1_w.T.astype(jnp.float32)       # PyTorch Linear: y = x @ W.T + b
    w2t = lin2_w.T.astype(jnp.float32)
    b1 = lin1_b.reshape(1, dim).astype(jnp.float32)
    b2 = lin2_b.reshape(1, dim).astype(jnp.float32)

    # --- Prologue: node vectors, computed once (not per row-block). ---
    n1, n2 = pl.pallas_call(
        functools.partial(_nodevec_kernel, alpha=float(alpha)),
        out_shape=(jax.ShapeDtypeStruct((n_pad, dim), jnp.float32),
                   jax.ShapeDtypeStruct((n_pad, dim), jnp.float32)),
    )(nv1, nv2, w1t, b1, w2t, b2)

    # Zero padded rows (bias + tanh makes them non-zero otherwise) so padded
    # adjacency columns are exactly 0 and never compete in a real row's top-k.
    valid = (jnp.arange(n_pad, dtype=jnp.int32) < n)[:, None]
    n1 = jnp.where(valid, n1, 0.0)
    n2 = jnp.where(valid, n2, 0.0)

    # Fused antisymmetric-matmul operands.
    lhs = jnp.concatenate([n1, n2], axis=1)           # (n_pad, 2*dim)
    rhs = jnp.concatenate([n2, -n1], axis=1)          # (n_pad, 2*dim)

    cost = pl.CostEstimate(
        flops=2 * n_pad * n_pad * (2 * dim),
        transcendentals=n_pad * n_pad,
        bytes_accessed=4 * (n_pad * n_pad + 2 * n_pad * 2 * dim),
    )

    adj_pad = pl.pallas_call(
        functools.partial(_adj_topk_kernel, alpha=float(alpha), topk=int(k)),
        out_shape=jax.ShapeDtypeStruct((n_pad, n_pad), jnp.float32),
        grid_spec=pltpu.PrefetchScalarGridSpec(
            num_scalar_prefetch=0,
            grid=(n_pad // row_tile,),
            in_specs=[
                pl.BlockSpec((row_tile, 2 * dim), lambda i: (i, 0)),   # block rows
                pl.BlockSpec((n_pad, 2 * dim), lambda i: (0, 0)),      # all columns
            ],
            out_specs=pl.BlockSpec((row_tile, n_pad), lambda i: (i, 0)),
        ),
        compiler_params=pltpu.CompilerParams(
            dimension_semantics=("parallel",),      # shards row-blocks across TCs
            vmem_limit_bytes=48 * 1024 * 1024,      # explicit: fits v7x's 64 MiB
        ),
        cost_estimate=cost,
    )(lhs, rhs)

    return adj_pad[:n, :n]

# TODO(synk): the static_feat branch of GraphConstructor (lin1/lin2 applied to
# gathered static features) is not implemented; only the embedding path is.


def _reference(idx, emb1, emb2, lin1_w, lin1_b, lin2_w, lin2_b, k, alpha):
    """Pure-JAX replica of the PyTorch forward (exact top-k via lax.top_k + scatter)."""
    nv1 = emb1[idx]
    nv2 = emb2[idx]
    n1 = jnp.tanh(alpha * (nv1 @ lin1_w.T + lin1_b))
    n2 = jnp.tanh(alpha * (nv2 @ lin2_w.T + lin2_b))
    a = n1 @ n2.T - n2 @ n1.T
    adj = jax.nn.relu(jnp.tanh(alpha * a))
    _, t1 = jax.lax.top_k(adj, k)
    n = adj.shape[0]
    mask = jnp.zeros_like(adj).at[jnp.arange(n)[:, None], t1].set(1.0)
    return adj * mask


if __name__ == "__main__":
    key = jax.random.PRNGKey(0)
    k_e1, k_e2, k_w1, k_b1, k_w2, k_b2, k_perm = jax.random.split(key, 7)

    # Small shapes consistent with MTGNN usage: nnodes nodes, dim-d embeddings,
    # idx a permutation of node ids, top-k neighbors per node.
    nnodes, dim, n, topk, alpha = 16, 32, 16, 8, 3.0

    # 0.1 scaling keeps tanh(alpha * .) away from exact f32 saturation (which
    # would create artificial top-k ties and make tie-breaking ambiguous).
    emb1 = 0.1 * jax.random.normal(k_e1, (nnodes, dim), dtype=jnp.float32)
    emb2 = 0.1 * jax.random.normal(k_e2, (nnodes, dim), dtype=jnp.float32)
    lin1_w = 0.1 * jax.random.normal(k_w1, (dim, dim), dtype=jnp.float32)
    lin1_b = 0.1 * jax.random.normal(k_b1, (dim,), dtype=jnp.float32)
    lin2_w = 0.1 * jax.random.normal(k_w2, (dim, dim), dtype=jnp.float32)
    lin2_b = 0.1 * jax.random.normal(k_b2, (dim,), dtype=jnp.float32)
    idx = jax.random.permutation(k_perm, jnp.arange(nnodes, dtype=jnp.int32))[:n]

    adj = graph_constructor_forward(idx, emb1, emb2, lin1_w, lin1_b, lin2_w, lin2_b,
                                    k=topk, alpha=alpha, row_tile=128)
    adj = jax.block_until_ready(adj)

    ref = _reference(idx, emb1, emb2, lin1_w, lin1_b, lin2_w, lin2_b, topk, alpha)
    assert adj.shape == (n, n), adj.shape
    assert jnp.allclose(adj, ref, atol=1e-4, rtol=1e-4), float(jnp.max(jnp.abs(adj - ref)))

    print("KERNEL_OK")
</pallas_src>

<mosaic_0001>
module attributes {stable_mosaic.version = 11 : i64} {
  func.func @_nodevec_kernel(%arg0: memref<128x32xf32, #tpu.memory_space<vmem>>, %arg1: memref<128x32xf32, #tpu.memory_space<vmem>>, %arg2: memref<32x32xf32, #tpu.memory_space<vmem>>, %arg3: memref<1x32xf32, #tpu.memory_space<vmem>>, %arg4: memref<32x32xf32, #tpu.memory_space<vmem>>, %arg5: memref<1x32xf32, #tpu.memory_space<vmem>>, %arg6: memref<128x32xf32, #tpu.memory_space<vmem>>, %arg7: memref<128x32xf32, #tpu.memory_space<vmem>>) attributes {dimension_semantics = [], scalar_prefetch = 0 : i64, scratch_operands = 0 : i64, tpu.core_type = #tpu.core_type<tc>} {
    %c0 = arith.constant 0 : index
    %c0_0 = arith.constant 0 : index
    %0 = vector.load %arg0[%c0, %c0_0] : memref<128x32xf32, #tpu.memory_space<vmem>>, vector<128x32xf32>
    %c0_1 = arith.constant 0 : index
    %c0_2 = arith.constant 0 : index
    %1 = vector.load %arg2[%c0_1, %c0_2] : memref<32x32xf32, #tpu.memory_space<vmem>>, vector<32x32xf32>
    %cst = arith.constant dense<0.000000e+00> : vector<128x32xf32>
    %2 = tpu.matmul %0, %1, %cst {dimension_numbers = #tpu.dot_dimension_numbers<[1], [0], [0], [1], [0, 0, 1, 1], [], []>} : vector<128x32xf32>, vector<32x32xf32>, vector<128x32xf32> -> vector<128x32xf32>
    %c0_3 = arith.constant 0 : index
    %c0_4 = arith.constant 0 : index
    %3 = vector.load %arg3[%c0_3, %c0_4] : memref<1x32xf32, #tpu.memory_space<vmem>>, vector<1x32xf32>
    %4 = vector.broadcast %3 : vector<1x32xf32> to vector<128x32xf32>
    %5 = arith.addf %2, %4 : vector<128x32xf32>
    %cst_5 = arith.constant 3.000000e+00 : f32
    %6 = vector.broadcast %cst_5 : f32 to vector<128x32xf32>
    %7 = arith.mulf %6, %5 : vector<128x32xf32>
    %8 = math.tanh %7 : vector<128x32xf32>
    %c0_6 = arith.constant 0 : index
    %c0_7 = arith.constant 0 : index
    %9 = vector.load %arg6[%c0_6, %c0_7] : memref<128x32xf32, #tpu.memory_space<vmem>>, vector<128x32xf32>
    tpu.vector_store %arg6[%c0_6, %c0_7], %8 {strides = array<i32>} : memref<128x32xf32, #tpu.memory_space<vmem>>, vector<128x32xf32>,
    %c0_8 = arith.constant 0 : index
    %c0_9 = arith.constant 0 : index
    %10 = vector.load %arg1[%c0_8, %c0_9] : memref<128x32xf32, #tpu.memory_space<vmem>>, vector<128x32xf32>
    %c0_10 = arith.constant 0 : index
    %c0_11 = arith.constant 0 : index
    %11 = vector.load %arg4[%c0_10, %c0_11] : memref<32x32xf32, #tpu.memory_space<vmem>>, vector<32x32xf32>
    %cst_12 = arith.constant dense<0.000000e+00> : vector<128x32xf32>
    %12 = tpu.matmul %10, %11, %cst_12 {dimension_numbers = #tpu.dot_dimension_numbers<[1], [0], [0], [1], [0, 0, 1, 1], [], []>} : vector<128x32xf32>, vector<32x32xf32>, vector<128x32xf32> -> vector<128x32xf32>
    %c0_13 = arith.constant 0 : index
    %c0_14 = arith.constant 0 : index
    %13 = vector.load %arg5[%c0_13, %c0_14] : memref<1x32xf32, #tpu.memory_space<vmem>>, vector<1x32xf32>
    %14 = vector.broadcast %13 : vector<1x32xf32> to vector<128x32xf32>
    %15 = arith.addf %12, %14 : vector<128x32xf32>
    %cst_15 = arith.constant 3.000000e+00 : f32
    %16 = vector.broadcast %cst_15 : f32 to vector<128x32xf32>
    %17 = arith.mulf %16, %15 : vector<128x32xf32>
    %18 = math.tanh %17 : vector<128x32xf32>
    %c0_16 = arith.constant 0 : index
    %c0_17 = arith.constant 0 : index
    %19 = vector.load %arg7[%c0_16, %c0_17] : memref<128x32xf32, #tpu.memory_space<vmem>>, vector<128x32xf32>
    tpu.vector_store %arg7[%c0_16, %c0_17], %18 {strides = array<i32>} : memref<128x32xf32, #tpu.memory_space<vmem>>, vector<128x32xf32>,
    return
  }
}

</mosaic_0001>

<llo_original>
// kernel: tpu_custom_call.1
$region0: #{tpu_custom_call.1}
  #allocation0 [shape = 'u32[]', space=smem, size = 0x4, offset = 0x4, fixed_abs, tag = 'smem constant byte address 0x4 - core index']
  #allocation1 [shape = 'u32[144,128]{1,0:T(1,128)}', space=vmem, size = 0x12000, scoped, tag = 'internal scratch']
  %s0 = inlined_call_operand.vmem [shape: f32[128,32], index: 0, kind: input, shape index: {}]
  %s1 = inlined_call_operand.vmem [shape: f32[128,32], index: 1, kind: input, shape index: {}]
  %s2 = inlined_call_operand.vmem [shape: f32[32,32], index: 2, kind: input, shape index: {}]
  %s3 = inlined_call_operand.vmem [shape: f32[1,32], index: 3, kind: input, shape index: {}]
  %s4 = inlined_call_operand.vmem [shape: f32[32,32], index: 4, kind: input, shape index: {}]
  %s5 = inlined_call_operand.vmem [shape: f32[1,32], index: 5, kind: input, shape index: {}]
  %s6 = inlined_call_operand.vmem [shape: f32[128,32], index: 6, kind: output, shape index: {0}]
  %s7 = inlined_call_operand.vmem [shape: f32[128,32], index: 7, kind: output, shape index: {1}]
  %8 = xla_tuple %s6, %s7
  %s9 = sld [smem:[#allocation0]]
  $region42: #{tpu_custom_call.1} parent=0
    _
  %s11 = ssub.s32 1, %s9
  %s12 = scalar_select 0, %s11, %s9
  // Predicated region
  $region2: #{tpu_custom_call.1} parent=0 // pred_check
    _
  $region3: #{tpu_custom_call.1} parent=0 // pred_check_branch
    %14 = sbr.rel (0) target = $region5
  $region4: #{tpu_custom_call.1} parent=0 // pred_region
    _
  $region5: #{tpu_custom_call.1} parent=0 // pred_fallthru
    _
  // Predicated region
  $region6: #{tpu_custom_call.1} parent=0 // pred_check
    _
  $region7: #{tpu_custom_call.1} parent=0 // pred_check_branch
    %16 = sbr.rel (0) target = $region9
  $region8: #{tpu_custom_call.1} parent=0 // pred_region
    _
  $region9: #{tpu_custom_call.1} parent=0 // pred_fallthru
    _
  // Predicated region
  $region10: #{tpu_custom_call.1} parent=0 // pred_check
    _
  $region11: #{tpu_custom_call.1} parent=0 // pred_check_branch
    %18 = sbr.rel (0) target = $region13
  $region12: #{tpu_custom_call.1} parent=0 // pred_region
    _
  $region13: #{tpu_custom_call.1} parent=0 // pred_fallthru
    _
  // Predicated region
  $region14: #{tpu_custom_call.1} parent=0 // pred_check
    _
  $region15: #{tpu_custom_call.1} parent=0 // pred_check_branch
    %20 = sbr.rel (0) target = $region17
  $region16: #{tpu_custom_call.1} parent=0 // pred_region
    _
  $region17: #{tpu_custom_call.1} parent=0 // pred_fallthru
    _
  // Predicated region
  $region18: #{tpu_custom_call.1} parent=0 // pred_check
    _
  $region19: #{tpu_custom_call.1} parent=0 // pred_check_branch
    %22 = sbr.rel (0) target = $region21
  $region20: #{tpu_custom_call.1} parent=0 // pred_region
    _
  $region21: #{tpu_custom_call.1} parent=0 // pred_fallthru
    _
  // Predicated region
  $region22: #{tpu_custom_call.1} parent=0 // pred_check
    _
  $region23: #{tpu_custom_call.1} parent=0 // pred_check_branch
    %24 = sbr.rel (0) target = $region25
  $region24: #{tpu_custom_call.1} parent=0 // pred_region
    _
  $region25: #{tpu_custom_call.1} parent=0 // pred_fallthru
    _
  %v25 = vld [vmem:[%s0] sm:$0xff]
  %v26 = vld [vmem:[%s0 + $0x8] sm:$0xff]
  %v27 = vld [vmem:[%s0 + $0x10] sm:$0xff]
  %v28 = vld [vmem:[%s0 + $0x18] sm:$0xff]
  %v29 = vld [vmem:[%s0 + $0x20] sm:$0xff]
  %v30 = vld [vmem:[%s0 + $0x28] sm:$0xff]
  %v31 = vld [vmem:[%s0 + $0x30] sm:$0xff]
  %v32 = vld [vmem:[%s0 + $0x38] sm:$0xff]
  %v33 = vld [vmem:[%s0 + $0x40] sm:$0xff]
  %v34 = vld [vmem:[%s0 + $0x48] sm:$0xff]
  %v35 = vld [vmem:[%s0 + $0x50] sm:$0xff]
  %v36 = vld [vmem:[%s0 + $0x58] sm:$0xff]
  %v37 = vld [vmem:[%s0 + $0x60] sm:$0xff]
  %v38 = vld [vmem:[%s0 + $0x68] sm:$0xff]
  %v39 = vld [vmem:[%s0 + $0x70] sm:$0xff]
  %v40 = vld [vmem:[%s0 + $0x78] sm:$0xff]
  %v41 = vld [vmem:[%s2] sm:$0xff]
  %v42 = vld [vmem:[%s2 + $0x8] sm:$0xff]
  %v43 = vld [vmem:[%s2 + $0x10] sm:$0xff]
  %v44 = vld [vmem:[%s2 + $0x18] sm:$0xff]
  %v45 = vld [vmem:[%s3] sm:$0x1]
  %v47 = vlaneseq
  %v48 = vshrl.u32 %v47, 7
  %v49 = vsub.s32 0, %v48
  %v50 = vrot.slane %v45, %v49
  %vm52 = vcmask 261120
  %v54 = vsel %vm52, %v25, 0
  %v57 = vsel %vm52, %v26, 0
  %v60 = vsel %vm52, %v27, 0
  %v63 = vsel %vm52, %v28, 0
  %v66 = vsel %vm52, %v29, 0
  %v69 = vsel %vm52, %v30, 0
  %v72 = vsel %vm52, %v31, 0
  %v75 = vsel %vm52, %v32, 0
  %v78 = vsel %vm52, %v33, 0
  %v81 = vsel %vm52, %v34, 0
  %v84 = vsel %vm52, %v35, 0
  %v87 = vsel %vm52, %v36, 0
  %v90 = vsel %vm52, %v37, 0
  %v93 = vsel %vm52, %v38, 0
  %v96 = vsel %vm52, %v39, 0
  %v99 = vsel %vm52, %v40, 0
  %101 = vmatprep.subr.mxu0 0.0
  %102 = vmatpush1.msra.mxu0 %v41
  %103 = vmatprep.subr.mxu0 0.0
  %104 = vmatpush1.msra.mxu0 %v42
  %105 = vmatprep.subr.mxu0 0.0
  %106 = vmatpush1.msra.mxu0 %v43
  %107 = vmatprep.subr.mxu0 0.0
  %108 = vmatpush1.msra.mxu0 %v44
  %109 = vmatprep.subr.mxu0 0.0
  %110 = vmatpush1.msra.mxu0 0.0
  %111 = vmatprep.subr.mxu0 0.0
  %112 = vmatpush1.msra.mxu0 0.0
  %113 = vmatprep.subr.mxu0 0.0
  %114 = vmatpush1.msra.mxu0 0.0
  %115 = vmatprep.subr.mxu0 0.0
  %116 = vmatpush1.msra.mxu0 0.0
  %117 = vmatprep.subr.mxu0 0.0
  %118 = vmatpush1.msra.mxu0 0.0
  %119 = vmatprep.subr.mxu0 0.0
  %120 = vmatpush1.msra.mxu0 0.0
  %121 = vmatprep.subr.mxu0 0.0
  %122 = vmatpush1.msra.mxu0 0.0
  %123 = vmatprep.subr.mxu0 0.0
  %124 = vmatpush1.msra.mxu0 0.0
  %125 = vmatprep.subr.mxu0 0.0
  %126 = vmatpush1.msra.mxu0 0.0
  %127 = vmatprep.subr.mxu0 0.0
  %128 = vmatpush1.msra.mxu0 0.0
  %129 = vmatprep.subr.mxu0 0.0
  %130 = vmatpush1.msra.mxu0 0.0
  %131 = vmatprep.subr.mxu0 0.0
  %132 = vmatpush1.msra.mxu0 0.0
  %133 = vmatprep.subr.mxu0 0.0
  %134 = vmatpush1.msra.mxu0 0.0
  %135 = vmatprep.subr.mxu0 0.0
  %136 = vmatpush1.msra.mxu0 0.0
  %137 = vmatprep.subr.mxu0 0.0
  %138 = vmatpush1.msra.mxu0 0.0
  %139 = vmatprep.subr.mxu0 0.0
  %140 = vmatpush1.msra.mxu0 0.0
  %141 = vmatprep.subr.mxu0 0.0
  %142 = vmatpush1.msra.mxu0 0.0
  %143 = vmatprep.subr.mxu0 0.0
  %144 = vmatpush1.msra.mxu0 0.0
  %145 = vmatprep.subr.mxu0 0.0
  %146 = vmatpush1.msra.mxu0 0.0
  %147 = vmatprep.subr.mxu0 0.0
  %148 = vmatpush1.msra.mxu0 0.0
  %149 = vmatprep.subr.mxu0 0.0
  %150 = vmatpush1.msra.mxu0 0.0
  %151 = vmatprep.subr.mxu0 0.0
  %152 = vmatpush1.msra.mxu0 0.0
  %153 = vmatprep.subr.mxu0 0.0
  %154 = vmatpush1.msra.mxu0 0.0
  %155 = vmatprep.subr.mxu0 0.0
  %156 = vmatpush1.msra.mxu0 0.0
  %157 = vmatprep.subr.mxu0 0.0
  %158 = vmatpush1.msra.mxu0 0.0
  %159 = vmatprep.subr.mxu0 0.0
  %160 = vmatpush1.msra.mxu0 0.0
  %161 = vmatprep.subr.mxu0 0.0
  %162 = vmatpush1.msra.mxu0 0.0
  %163 = vmatprep.subr.mxu0 0.0
  %164 = vmatpush1.msra.mxu0 0.0
  %165 = vmatprep.mubr.f32.mxu0 0.0
  %166 = vmatmul.mubr.f32.gmra.mrb[0].mxu0 %v54
  %v167 = vpop.f32.mrb[0].mxu0
  %v168 = vadd.f32 %v50, %v167
  %v169 = vpop.f32.mrb[0].mxu0
  %170 = vmatprep.mubr.f32.mxu0 0.0
  %171 = vmatmul.mubr.f32.gmra.mrb[0].mxu0 %v57
  %v172 = vpop.f32.mrb[0].mxu0
  %v173 = vadd.f32 %v50, %v172
  %v174 = vpop.f32.mrb[0].mxu0
  %175 = vmatprep.mubr.f32.mxu0 0.0
  %176 = vmatmul.mubr.f32.gmra.mrb[0].mxu0 %v60
  %v177 = vpop.f32.mrb[0].mxu0
  %v178 = vadd.f32 %v50, %v177
  %v179 = vpop.f32.mrb[0].mxu0
  %180 = vmatprep.mubr.f32.mxu0 0.0
  %181 = vmatmul.mubr.f32.gmra.mrb[0].mxu0 %v63
  %v182 = vpop.f32.mrb[0].mxu0
  %v183 = vadd.f32 %v50, %v182
  %v184 = vpop.f32.mrb[0].mxu0
  %185 = vmatprep.mubr.f32.mxu0 0.0
  %186 = vmatmul.mubr.f32.gmra.mrb[0].mxu0 %v66
  %v187 = vpop.f32.mrb[0].mxu0
  %v188 = vadd.f32 %v50, %v187
  %v189 = vpop.f32.mrb[0].mxu0
  %190 = vmatprep.mubr.f32.mxu0 0.0
  %191 = vmatmul.mubr.f32.gmra.mrb[0].mxu0 %v69
  %v192 = vpop.f32.mrb[0].mxu0
  %v193 = vadd.f32 %v50, %v192
  %v194 = vpop.f32.mrb[0].mxu0
  %195 = vmatprep.mubr.f32.mxu0 0.0
  %196 = vmatmul.mubr.f32.gmra.mrb[0].mxu0 %v72
  %v197 = vpop.f32.mrb[0].mxu0
  %v198 = vadd.f32 %v50, %v197
  %v199 = vpop.f32.mrb[0].mxu0
  %200 = vmatprep.mubr.f32.mxu0 0.0
  %201 = vmatmul.mubr.f32.gmra.mrb[0].mxu0 %v75
  %v202 = vpop.f32.mrb[0].mxu0
  %v203 = vadd.f32 %v50, %v202
  %v204 = vpop.f32.mrb[0].mxu0
  %205 = vmatprep.mubr.f32.mxu0 0.0
  %206 = vmatmul.mubr.f32.gmra.mrb[0].mxu0 %v78
  %v207 = vpop.f32.mrb[0].mxu0
  %v208 = vadd.f32 %v50, %v207
  %v209 = vpop.f32.mrb[0].mxu0
  %210 = vmatprep.mubr.f32.mxu0 0.0
  %211 = vmatmul.mubr.f32.gmra.mrb[0].mxu0 %v81
  %v212 = vpop.f32.mrb[0].mxu0
  %v213 = vadd.f32 %v50, %v212
  %v214 = vpop.f32.mrb[0].mxu0
  %215 = vmatprep.mubr.f32.mxu0 0.0
  %216 = vmatmul.mubr.f32.gmra.mrb[0].mxu0 %v84
  %v217 = vpop.f32.mrb[0].mxu0
  %v218 = vadd.f32 %v50, %v217
  %v219 = vpop.f32.mrb[0].mxu0
  %220 = vmatprep.mubr.f32.mxu0 0.0
  %221 = vmatmul.mubr.f32.gmra.mrb[0].mxu0 %v87
  %v222 = vpop.f32.mrb[0].mxu0
  %v223 = vadd.f32 %v50, %v222
  %v224 = vpop.f32.mrb[0].mxu0
  %225 = vmatprep.mubr.f32.mxu0 0.0
  %226 = vmatmul.mubr.f32.gmra.mrb[0].mxu0 %v90
  %v227 = vpop.f32.mrb[0].mxu0
  %v228 = vadd.f32 %v50, %v227
  %v229 = vpop.f32.mrb[0].mxu0
  %230 = vmatprep.mubr.f32.mxu0 0.0
  %231 = vmatmul.mubr.f32.gmra.mrb[0].mxu0 %v93
  %v232 = vpop.f32.mrb[0].mxu0
  %v233 = vadd.f32 %v50, %v232
  %v234 = vpop.f32.mrb[0].mxu0
  %235 = vmatprep.mubr.f32.mxu0 0.0
  %236 = vmatmul.mubr.f32.gmra.mrb[0].mxu0 %v96
  %v237 = vpop.f32.mrb[0].mxu0
  %v238 = vadd.f32 %v50, %v237
  %v239 = vpop.f32.mrb[0].mxu0
  %240 = vmatprep.mubr.f32.mxu0 0.0
  %241 = vmatmul.mubr.f32.gmra.mrb[0].mxu0 %v99
  %v242 = vpop.f32.mrb[0].mxu0
  %v243 = vadd.f32 %v50, %v242
  %v244 = vpop.f32.mrb[0].mxu0
  %245 = vdwg.mxu0
  %v246 = vmul.f32 %v168, 3.0
  %v247 = vmul.f32 %v173, 3.0
  %v248 = vmul.f32 %v178, 3.0
  %v249 = vmul.f32 %v183, 3.0
  %v250 = vmul.f32 %v188, 3.0
  %v251 = vmul.f32 %v193, 3.0
  %v252 = vmul.f32 %v198, 3.0
  %v253 = vmul.f32 %v203, 3.0
  %v254 = vmul.f32 %v208, 3.0
  %v255 = vmul.f32 %v213, 3.0
  %v256 = vmul.f32 %v218, 3.0
  %v257 = vmul.f32 %v223, 3.0
  %v258 = vmul.f32 %v228, 3.0
  %v259 = vmul.f32 %v233, 3.0
  %v260 = vmul.f32 %v238, 3.0
  %v261 = vmul.f32 %v243, 3.0
  %v262 = vtanh.pop %v246
  %v263 = vtanh.pop %v247
  %v264 = vtanh.pop %v248
  %v265 = vtanh.pop %v249
  %v266 = vtanh.pop %v250
  %v267 = vtanh.pop %v251
  %v268 = vtanh.pop %v252
  %v269 = vtanh.pop %v253
  %v270 = vtanh.pop %v254
  %v271 = vtanh.pop %v255
  %v272 = vtanh.pop %v256
  %v273 = vtanh.pop %v257
  %v274 = vtanh.pop %v258
  %v275 = vtanh.pop %v259
  %v276 = vtanh.pop %v260
  %v277 = vtanh.pop %v261
  %278 = vst.msk [vmem:[%s6] sm:$0xff] %vm52, %v262
  %279 = vst.msk [vmem:[%s6 + $0x8] sm:$0xff] %vm52, %v263
  %280 = vst.msk [vmem:[%s6 + $0x10] sm:$0xff] %vm52, %v264
  %281 = vst.msk [vmem:[%s6 + $0x18] sm:$0xff] %vm52, %v265
  %282 = vst.msk [vmem:[%s6 + $0x20] sm:$0xff] %vm52, %v266
  %283 = vst.msk [vmem:[%s6 + $0x28] sm:$0xff] %vm52, %v267
  %284 = vst.msk [vmem:[%s6 + $0x30] sm:$0xff] %vm52, %v268
  %285 = vst.msk [vmem:[%s6 + $0x38] sm:$0xff] %vm52, %v269
  %286 = vst.msk [vmem:[%s6 + $0x40] sm:$0xff] %vm52, %v270
  %287 = vst.msk [vmem:[%s6 + $0x48] sm:$0xff] %vm52, %v271
  %288 = vst.msk [vmem:[%s6 + $0x50] sm:$0xff] %vm52, %v272
  %289 = vst.msk [vmem:[%s6 + $0x58] sm:$0xff] %vm52, %v273
  %290 = vst.msk [vmem:[%s6 + $0x60] sm:$0xff] %vm52, %v274
  %291 = vst.msk [vmem:[%s6 + $0x68] sm:$0xff] %vm52, %v275
  %292 = vst.msk [vmem:[%s6 + $0x70] sm:$0xff] %vm52, %v276
  %293 = vst.msk [vmem:[%s6 + $0x78] sm:$0xff] %vm52, %v277
  %v294 = vld [vmem:[%s1] sm:$0xff]
  %v295 = vld [vmem:[%s1 + $0x8] sm:$0xff]
  %v296 = vld [vmem:[%s1 + $0x10] sm:$0xff]
  %v297 = vld [vmem:[%s1 + $0x18] sm:$0xff]
  %v298 = vld [vmem:[%s1 + $0x20] sm:$0xff]
  %v299 = vld [vmem:[%s1 + $0x28] sm:$0xff]
  %v300 = vld [vmem:[%s1 + $0x30] sm:$0xff]
  %v301 = vld [vmem:[%s1 + $0x38] sm:$0xff]
  %v302 = vld [vmem:[%s1 + $0x40] sm:$0xff]
  %v303 = vld [vmem:[%s1 + $0x48] sm:$0xff]
  %v304 = vld [vmem:[%s1 + $0x50] sm:$0xff]
  %v305 = vld [vmem:[%s1 + $0x58] sm:$0xff]
  %v306 = vld [vmem:[%s1 + $0x60] sm:$0xff]
  %v307 = vld [vmem:[%s1 + $0x68] sm:$0xff]
  %v308 = vld [vmem:[%s1 + $0x70] sm:$0xff]
  %v309 = vld [vmem:[%s1 + $0x78] sm:$0xff]
  %v310 = vld [vmem:[%s4] sm:$0xff]
  %v311 = vld [vmem:[%s4 + $0x8] sm:$0xff]
  %v312 = vld [vmem:[%s4 + $0x10] sm:$0xff]
  %v313 = vld [vmem:[%s4 + $0x18] sm:$0xff]
  %v314 = vld [vmem:[%s5] sm:$0x1]
  %v316 = vlaneseq
  %v317 = vshrl.u32 %v316, 7
  %v318 = vsub.s32 0, %v317
  %v319 = vrot.slane %v314, %v318
  %v322 = vsel %vm52, %v294, 0
  %v325 = vsel %vm52, %v295, 0
  %v328 = vsel %vm52, %v296, 0
  %v331 = vsel %vm52, %v297, 0
  %v334 = vsel %vm52, %v298, 0
  %v337 = vsel %vm52, %v299, 0
  %v340 = vsel %vm52, %v300, 0
  %v343 = vsel %vm52, %v301, 0
  %v346 = vsel %vm52, %v302, 0
  %v349 = vsel %vm52, %v303, 0
  %v352 = vsel %vm52, %v304, 0
  %v355 = vsel %vm52, %v305, 0
  %v358 = vsel %vm52, %v306, 0
  %v361 = vsel %vm52, %v307, 0
  %v364 = vsel %vm52, %v308, 0
  %v367 = vsel %vm52, %v309, 0
  %369 = vmatprep.subr.mxu0 0.0
  %370 = vmatpush1.msra.mxu0 %v310
  %371 = vmatprep.subr.mxu0 0.0
  %372 = vmatpush1.msra.mxu0 %v311
  %373 = vmatprep.subr.mxu0 0.0
  %374 = vmatpush1.msra.mxu0 %v312
  %375 = vmatprep.subr.mxu0 0.0
  %376 = vmatpush1.msra.mxu0 %v313
  %377 = vmatprep.subr.mxu0 0.0
  %378 = vmatpush1.msra.mxu0 0.0
  %379 = vmatprep.subr.mxu0 0.0
  %380 = vmatpush1.msra.mxu0 0.0
  %381 = vmatprep.subr.mxu0 0.0
  %382 = vmatpush1.msra.mxu0 0.0
  %383 = vmatprep.subr.mxu0 0.0
  %384 = vmatpush1.msra.mxu0 0.0
  %385 = vmatprep.subr.mxu0 0.0
  %386 = vmatpush1.msra.mxu0 0.0
  %387 = vmatprep.subr.mxu0 0.0
  %388 = vmatpush1.msra.mxu0 0.0
  %389 = vmatprep.subr.mxu0 0.0
  %390 = vmatpush1.msra.mxu0 0.0
  %391 = vmatprep.subr.mxu0 0.0
  %392 = vmatpush1.msra.mxu0 0.0
  %393 = vmatprep.subr.mxu0 0.0
  %394 = vmatpush1.msra.mxu0 0.0
  %395 = vmatprep.subr.mxu0 0.0
  %396 = vmatpush1.msra.mxu0 0.0
  %397 = vmatprep.subr.mxu0 0.0
  %398 = vmatpush1.msra.mxu0 0.0
  %399 = vmatprep.subr.mxu0 0.0
  %400 = vmatpush1.msra.mxu0 0.0
  %401 = vmatprep.subr.mxu0 0.0
  %402 = vmatpush1.msra.mxu0 0.0
  %403 = vmatprep.subr.mxu0 0.0
  %404 = vmatpush1.msra.mxu0 0.0
  %405 = vmatprep.subr.mxu0 0.0
  %406 = vmatpush1.msra.mxu0 0.0
  %407 = vmatprep.subr.mxu0 0.0
  %408 = vmatpush1.msra.mxu0 0.0
  %409 = vmatprep.subr.mxu0 0.0
  %410 = vmatpush1.msra.mxu0 0.0
  %411 = vmatprep.subr.mxu0 0.0
  %412 = vmatpush1.msra.mxu0 0.0
  %413 = vmatprep.subr.mxu0 0.0
  %414 = vmatpush1.msra.mxu0 0.0
  %415 = vmatprep.subr.mxu0 0.0
  %416 = vmatpush1.msra.mxu0 0.0
  %417 = vmatprep.subr.mxu0 0.0
  %418 = vmatpush1.msra.mxu0 0.0
  %419 = vmatprep.subr.mxu0 0.0
  %420 = vmatpush1.msra.mxu0 0.0
  %421 = vmatprep.subr.mxu0 0.0
  %422 = vmatpush1.msra.mxu0 0.0
  %423 = vmatprep.subr.mxu0 0.0
  %424 = vmatpush1.msra.mxu0 0.0
  %425 = vmatprep.subr.mxu0 0.0
  %426 = vmatpush1.msra.mxu0 0.0
  %427 = vmatprep.subr.mxu0 0.0
  %428 = vmatpush1.msra.mxu0 0.0
  %429 = vmatprep.subr.mxu0 0.0
  %430 = vmatpush1.msra.mxu0 0.0
  %431 = vmatprep.subr.mxu0 0.0
  %432 = vmatpush1.msra.mxu0 0.0
  %433 = vmatprep.mubr.f32.mxu0 0.0
  %434 = vmatmul.mubr.f32.gmra.mrb[0].mxu0 %v322
  %v435 = vpop.f32.mrb[0].mxu0
  %v436 = vadd.f32 %v319, %v435
  %v437 = vpop.f32.mrb[0].mxu0
  %438 = vmatprep.mubr.f32.mxu0 0.0
  %439 = vmatmul.mubr.f32.gmra.mrb[0].mxu0 %v325
  %v440 = vpop.f32.mrb[0].mxu0
  %v441 = vadd.f32 %v319, %v440
  %v442 = vpop.f32.mrb[0].mxu0
  %443 = vmatprep.mubr.f32.mxu0 0.0
  %444 = vmatmul.mubr.f32.gmra.mrb[0].mxu0 %v328
  %v445 = vpop.f32.mrb[0].mxu0
  %v446 = vadd.f32 %v319, %v445
  %v447 = vpop.f32.mrb[0].mxu0
  %448 = vmatprep.mubr.f32.mxu0 0.0
  %449 = vmatmul.mubr.f32.gmra.mrb[0].mxu0 %v331
  %v450 = vpop.f32.mrb[0].mxu0
  %v451 = vadd.f32 %v319, %v450
  %v452 = vpop.f32.mrb[0].mxu0
  %453 = vmatprep.mubr.f32.mxu0 0.0
  %454 = vmatmul.mubr.f32.gmra.mrb[0].mxu0 %v334
  %v455 = vpop.f32.mrb[0].mxu0
  %v456 = vadd.f32 %v319, %v455
  %v457 = vpop.f32.mrb[0].mxu0
  %458 = vmatprep.mubr.f32.mxu0 0.0
  %459 = vmatmul.mubr.f32.gmra.mrb[0].mxu0 %v337
  %v460 = vpop.f32.mrb[0].mxu0
  %v461 = vadd.f32 %v319, %v460
  %v462 = vpop.f32.mrb[0].mxu0
  %463 = vmatprep.mubr.f32.mxu0 0.0
  %464 = vmatmul.mubr.f32.gmra.mrb[0].mxu0 %v340
  %v465 = vpop.f32.mrb[0].mxu0
  %v466 = vadd.f32 %v319, %v465
  %v467 = vpop.f32.mrb[0].mxu0
  %468 = vmatprep.mubr.f32.mxu0 0.0
  %469 = vmatmul.mubr.f32.gmra.mrb[0].mxu0 %v343
  %v470 = vpop.f32.mrb[0].mxu0
  %v471 = vadd.f32 %v319, %v470
  %v472 = vpop.f32.mrb[0].mxu0
  %473 = vmatprep.mubr.f32.mxu0 0.0
  %474 = vmatmul.mubr.f32.gmra.mrb[0].mxu0 %v346
  %v475 = vpop.f32.mrb[0].mxu0
  %v476 = vadd.f32 %v319, %v475
  %v477 = vpop.f32.mrb[0].mxu0
  %478 = vmatprep.mubr.f32.mxu0 0.0
  %479 = vmatmul.mubr.f32.gmra.mrb[0].mxu0 %v349
  %v480 = vpop.f32.mrb[0].mxu0
  %v481 = vadd.f32 %v319, %v480
  %v482 = vpop.f32.mrb[0].mxu0
  %483 = vmatprep.mubr.f32.mxu0 0.0
  %484 = vmatmul.mubr.f32.gmra.mrb[0].mxu0 %v352
  %v485 = vpop.f32.mrb[0].mxu0
  %v486 = vadd.f32 %v319, %v485
  %v487 = vpop.f32.mrb[0].mxu0
  %488 = vmatprep.mubr.f32.mxu0 0.0
  %489 = vmatmul.mubr.f32.gmra.mrb[0].mxu0 %v355
  %v490 = vpop.f32.mrb[0].mxu0
  %v491 = vadd.f32 %v319, %v490
  %v492 = vpop.f32.mrb[0].mxu0
  %493 = vmatprep.mubr.f32.mxu0 0.0
  %494 = vmatmul.mubr.f32.gmra.mrb[0].mxu0 %v358
  %v495 = vpop.f32.mrb[0].mxu0
  %v496 = vadd.f32 %v319, %v495
  %v497 = vpop.f32.mrb[0].mxu0
  %498 = vmatprep.mubr.f32.mxu0 0.0
  %499 = vmatmul.mubr.f32.gmra.mrb[0].mxu0 %v361
  %v500 = vpop.f32.mrb[0].mxu0
  %v501 = vadd.f32 %v319, %v500
  %v502 = vpop.f32.mrb[0].mxu0
  %503 = vmatprep.mubr.f32.mxu0 0.0
  %504 = vmatmul.mubr.f32.gmra.mrb[0].mxu0 %v364
  %v505 = vpop.f32.mrb[0].mxu0
  %v506 = vadd.f32 %v319, %v505
  %v507 = vpop.f32.mrb[0].mxu0
  %508 = vmatprep.mubr.f32.mxu0 0.0
  %509 = vmatmul.mubr.f32.gmra.mrb[0].mxu0 %v367
  %v510 = vpop.f32.mrb[0].mxu0
  %v511 = vadd.f32 %v319, %v510
  %v512 = vpop.f32.mrb[0].mxu0
  %513 = vdwg.mxu0
  %v514 = vmul.f32 %v436, 3.0
  %v515 = vmul.f32 %v441, 3.0
  %v516 = vmul.f32 %v446, 3.0
  %v517 = vmul.f32 %v451, 3.0
  %v518 = vmul.f32 %v456, 3.0
  %v519 = vmul.f32 %v461, 3.0
  %v520 = vmul.f32 %v466, 3.0
  %v521 = vmul.f32 %v471, 3.0
  %v522 = vmul.f32 %v476, 3.0
  %v523 = vmul.f32 %v481, 3.0
  %v524 = vmul.f32 %v486, 3.0
  %v525 = vmul.f32 %v491, 3.0
  %v526 = vmul.f32 %v496, 3.0
  %v527 = vmul.f32 %v501, 3.0
  %v528 = vmul.f32 %v506, 3.0
  %v529 = vmul.f32 %v511, 3.0
  %v530 = vtanh.pop %v514
  %v531 = vtanh.pop %v515
  %v532 = vtanh.pop %v516
  %v533 = vtanh.pop %v517
  %v534 = vtanh.pop %v518
  %v535 = vtanh.pop %v519
  %v536 = vtanh.pop %v520
  %v537 = vtanh.pop %v521
  %v538 = vtanh.pop %v522
  %v539 = vtanh.pop %v523
  %v540 = vtanh.pop %v524
  %v541 = vtanh.pop %v525
  %v542 = vtanh.pop %v526
  %v543 = vtanh.pop %v527
  %v544 = vtanh.pop %v528
  %v545 = vtanh.pop %v529
  %546 = vst.msk [vmem:[%s7] sm:$0xff] %vm52, %v530
  %547 = vst.msk [vmem:[%s7 + $0x8] sm:$0xff] %vm52, %v531
  %548 = vst.msk [vmem:[%s7 + $0x10] sm:$0xff] %vm52, %v532
  %549 = vst.msk [vmem:[%s7 + $0x18] sm:$0xff] %vm52, %v533
  %550 = vst.msk [vmem:[%s7 + $0x20] sm:$0xff] %vm52, %v534
  %551 = vst.msk [vmem:[%s7 + $0x28] sm:$0xff] %vm52, %v535
  %552 = vst.msk [vmem:[%s7 + $0x30] sm:$0xff] %vm52, %v536
  %553 = vst.msk [vmem:[%s7 + $0x38] sm:$0xff] %vm52, %v537
  %554 = vst.msk [vmem:[%s7 + $0x40] sm:$0xff] %vm52, %v538
  %555 = vst.msk [vmem:[%s7 + $0x48] sm:$0xff] %vm52, %v539
  %556 = vst.msk [vmem:[%s7 + $0x50] sm:$0xff] %vm52, %v540
  %557 = vst.msk [vmem:[%s7 + $0x58] sm:$0xff] %vm52, %v541
  %558 = vst.msk [vmem:[%s7 + $0x60] sm:$0xff] %vm52, %v542
  %559 = vst.msk [vmem:[%s7 + $0x68] sm:$0xff] %vm52, %v543
  %560 = vst.msk [vmem:[%s7 + $0x70] sm:$0xff] %vm52, %v544
  %561 = vst.msk [vmem:[%s7 + $0x78] sm:$0xff] %vm52, %v545
  // Predicated region
  $region26: #{tpu_custom_call.1} parent=0 // pred_check
    _
  $region27: #{tpu_custom_call.1} parent=0 // pred_check_branch
    %563 = sbr.rel (0) target = $region29
  $region28: #{tpu_custom_call.1} parent=0 // pred_region
    _
  $region29: #{tpu_custom_call.1} parent=0 // pred_fallthru
    _
  // Predicated region
  $region30: #{tpu_custom_call.1} parent=0 // pred_check
    _
  $region31: #{tpu_custom_call.1} parent=0 // pred_check_branch
    %565 = sbr.rel (0) target = $region33
  $region32: #{tpu_custom_call.1} parent=0 // pred_region
    _
  $region33: #{tpu_custom_call.1} parent=0 // pred_fallthru
    _
  // Predicated region
  $region34: #{tpu_custom_call.1} parent=0 // pred_check
    _
  $region35: #{tpu_custom_call.1} parent=0 // pred_check_branch
    %567 = sbr.rel (0) target = $region37
  $region36: #{tpu_custom_call.1} parent=0 // pred_region
    _
  $region37: #{tpu_custom_call.1} parent=0 // pred_fallthru
    _
  // Predicated region
  $region38: #{tpu_custom_call.1} parent=0 // pred_check
    _
  $region39: #{tpu_custom_call.1} parent=0 // pred_check_branch
    %569 = sbr.rel (0) target = $region41
  $region40: #{tpu_custom_call.1} parent=0 // pred_region
    _
  $region41: #{tpu_custom_call.1} parent=0 // pred_fallthru
    _

</llo_original>
